<compile_context>
chip_gen: v7x
topology: tpu7x:2x2x1
jax: 0.10.0
libtpu: 0.0.40
codegen_flags: <defaults>
</compile_context>

<pallas_src>
import functools

import jax
import jax.numpy as jnp
from jax.experimental import pallas as pl
from jax.experimental.pallas import tpu as pltpu


def _round_up(x, m):
    return ((x + m - 1) // m) * m


def _expert_policy_kernel(x_ref, w1_ref, b1_ref, w2_ref, b2_ref, o_ref, *, a_valid):
    # Layer 1: Linear(S -> 128) on the MXU, f32 accumulate. (TB, S) @ (S, H).
    h = jnp.dot(x_ref[...], w1_ref[...], preferred_element_type=jnp.float32)
    # Bias + ReLU epilogue on the VPU (broadcast (1, H) over the batch tile).
    h = jnp.maximum(h + b1_ref[...], 0.0)
    # Layer 2: Linear(128 -> Ap) at lane-dense N against the padded w2, then
    # store only the valid A columns (cuts output HBM writeback up to 16x).
    out = jnp.dot(h, w2_ref[...], preferred_element_type=jnp.float32)
    o_ref[...] = (out[:, :a_valid] + b2_ref[...]).astype(o_ref.dtype)


def expert_policy_forward(state, w1, b1, w2, b2, *, block_b=2048):
    """state: [B, S] f32 -> [B, A] f32.  w1:[S,128], b1:[1,128], w2:[128,A], b2:[1,A]."""
    B, S = state.shape
    H = w1.shape[1]
    A = w2.shape[1]
    assert w1.shape == (S, H) and b1.shape == (1, H)
    assert w2.shape == (H, A) and b2.shape == (1, A)

    # Batch tile: multiple of 8 (sublane rule), capped at ~B/2 so the grid
    # keeps >= 2 steps (v7x megacore sharding) and at block_b for VMEM sanity.
    TB = max(8, min(block_b, _round_up(pl.cdiv(B, 2), 8)))
    grid_b = pl.cdiv(B, TB)  # ragged last block handled by Pallas masking

    # Keep the second matmul lane-dense: zero-pad w2 columns (tiny, one-time).
    Ap = _round_up(A, 128)
    w2_p = jnp.pad(w2, ((0, 0), (0, Ap - A))) if Ap != A else w2

    cost = pl.CostEstimate(
        flops=2 * B * (S * H + H * Ap),
        transcendentals=0,
        bytes_accessed=4 * (B * S + S * H + H + H * Ap + A + B * A),
    )

    # Double-buffered x/out tiles + resident weights (+ headroom); only raise
    # the scoped-VMEM limit when actually needed (v5e default is 16 MiB).
    est_vmem = 4 * (2 * TB * (S + A) + S * H + H + H * Ap + A) + (2 << 20)
    compiler_params = pltpu.CompilerParams(
        dimension_semantics=("parallel",),  # v7x: shard batch across 2 TCs
        vmem_limit_bytes=est_vmem if est_vmem > (16 << 20) else None,
    )

    kernel = functools.partial(_expert_policy_kernel, a_valid=A)
    return pl.pallas_call(
        kernel,
        out_shape=jax.ShapeDtypeStruct((B, A), jnp.float32),
        grid_spec=pltpu.PrefetchScalarGridSpec(
            num_scalar_prefetch=0,
            grid=(grid_b,),
            in_specs=[
                pl.BlockSpec((TB, S), lambda i: (i, 0)),   # x tile moves with batch
                pl.BlockSpec((S, H), lambda i: (0, 0)),    # w1 VMEM-resident
                pl.BlockSpec((1, H), lambda i: (0, 0)),    # b1 VMEM-resident
                pl.BlockSpec((H, Ap), lambda i: (0, 0)),   # w2 (lane-padded) resident
                pl.BlockSpec((1, A), lambda i: (0, 0)),    # b2 resident (unpadded)
            ],
            out_specs=pl.BlockSpec((TB, A), lambda i: (i, 0)),
        ),
        compiler_params=compiler_params,
        cost_estimate=cost,
    )(state, w1, b1, w2_p, b2)


def init_params(key, state_size, action_size, hidden=128):
    """nn.Linear-style init. PyTorch stores weight as [out, in]; we store the
    transpose [in, out] so the kernel computes x @ W directly."""
    k1, k2, k3, k4 = jax.random.split(key, 4)
    bound1 = 1.0 / (state_size ** 0.5)
    bound2 = 1.0 / (hidden ** 0.5)
    w1 = jax.random.uniform(k1, (state_size, hidden), jnp.float32, -bound1, bound1)
    b1 = jax.random.uniform(k2, (1, hidden), jnp.float32, -bound1, bound1)
    w2 = jax.random.uniform(k3, (hidden, action_size), jnp.float32, -bound2, bound2)
    b2 = jax.random.uniform(k4, (1, action_size), jnp.float32, -bound2, bound2)
    return w1, b1, w2, b2


def reference_forward(state, w1, b1, w2, b2):
    # Plain f32 reference matching the PyTorch module numerics.
    h = jnp.dot(state, w1, precision=jax.lax.Precision.HIGHEST) + b1
    h = jnp.maximum(h, 0.0)
    return jnp.dot(h, w2, precision=jax.lax.Precision.HIGHEST) + b2


if __name__ == "__main__":
    key = jax.random.PRNGKey(0)
    state_size, action_size, batch = 32, 8, 8

    k_params, k_state = jax.random.split(key)
    w1, b1, w2, b2 = init_params(k_params, state_size, action_size)
    state = jax.random.normal(k_state, (batch, state_size), jnp.float32)

    out = expert_policy_forward(state, w1, b1, w2, b2)
    out = jax.block_until_ready(out)

    ref = reference_forward(state, w1, b1, w2, b2)
    assert out.shape == (batch, action_size)
    assert jnp.allclose(out, ref, atol=1e-2, rtol=1e-2), "mismatch vs f32 reference"

    print("KERNEL_OK")
</pallas_src>

<mosaic_0001>
module attributes {stable_mosaic.version = 11 : i64} {
  func.func @_expert_policy_kernel(%arg0: i32, %arg1: memref<8x32xf32, #tpu.memory_space<vmem>>, %arg2: memref<32x128xf32, #tpu.memory_space<vmem>>, %arg3: memref<1x128xf32, #tpu.memory_space<vmem>>, %arg4: memref<128x128xf32, #tpu.memory_space<vmem>>, %arg5: memref<1x8xf32, #tpu.memory_space<vmem>>, %arg6: memref<8x8xf32, #tpu.memory_space<vmem>>) attributes {dimension_semantics = [#tpu.dimension_semantics<parallel>], iteration_bounds = array<i64: 1>, scalar_prefetch = 0 : i64, scratch_operands = 0 : i64, tpu.core_type = #tpu.core_type<tc>, window_params = [{transform_indices = @transform_0, window_bounds = array<i64: 8, 32>}, {pipeline_mode = #tpu.pipeline_mode<synchronous>, transform_indices = @transform_1, window_bounds = array<i64: 32, 128>}, {pipeline_mode = #tpu.pipeline_mode<synchronous>, transform_indices = @transform_2, window_bounds = array<i64: 1, 128>}, {pipeline_mode = #tpu.pipeline_mode<synchronous>, transform_indices = @transform_3, window_bounds = array<i64: 128, 128>}, {pipeline_mode = #tpu.pipeline_mode<synchronous>, transform_indices = @transform_4, window_bounds = array<i64: 1, 8>}, {transform_indices = @transform_5, window_bounds = array<i64: 8, 8>}]} {
    %c0 = arith.constant 0 : index
    %c0_0 = arith.constant 0 : index
    %0 = vector.load %arg1[%c0, %c0_0] : memref<8x32xf32, #tpu.memory_space<vmem>>, vector<8x32xf32>
    %c0_1 = arith.constant 0 : index
    %c0_2 = arith.constant 0 : index
    %1 = vector.load %arg2[%c0_1, %c0_2] : memref<32x128xf32, #tpu.memory_space<vmem>>, vector<32x128xf32>
    %cst = arith.constant dense<0.000000e+00> : vector<8x128xf32>
    %2 = tpu.matmul %0, %1, %cst {dimension_numbers = #tpu.dot_dimension_numbers<[1], [0], [0], [1], [0, 0, 1, 1], [], []>} : vector<8x32xf32>, vector<32x128xf32>, vector<8x128xf32> -> vector<8x128xf32>
    %c0_3 = arith.constant 0 : index
    %c0_4 = arith.constant 0 : index
    %3 = vector.load %arg3[%c0_3, %c0_4] : memref<1x128xf32, #tpu.memory_space<vmem>>, vector<1x128xf32>
    %4 = vector.broadcast %3 : vector<1x128xf32> to vector<8x128xf32>
    %5 = arith.addf %2, %4 : vector<8x128xf32>
    %cst_5 = arith.constant 0.000000e+00 : f32
    %6 = vector.broadcast %cst_5 : f32 to vector<8x128xf32>
    %7 = arith.maximumf %5, %6 : vector<8x128xf32>
    %c0_6 = arith.constant 0 : index
    %c0_7 = arith.constant 0 : index
    %8 = vector.load %arg4[%c0_6, %c0_7] : memref<128x128xf32, #tpu.memory_space<vmem>>, vector<128x128xf32>
    %cst_8 = arith.constant dense<0.000000e+00> : vector<8x128xf32>
    %9 = tpu.matmul %7, %8, %cst_8 {dimension_numbers = #tpu.dot_dimension_numbers<[1], [0], [0], [1], [0, 0, 1, 1], [], []>} : vector<8x128xf32>, vector<128x128xf32>, vector<8x128xf32> -> vector<8x128xf32>
    %10 = vector.extract_strided_slice %9 {offsets = [0, 0], sizes = [8, 8], strides = [1, 1]} : vector<8x128xf32> to vector<8x8xf32>
    %c0_9 = arith.constant 0 : index
    %c0_10 = arith.constant 0 : index
    %11 = vector.load %arg5[%c0_9, %c0_10] : memref<1x8xf32, #tpu.memory_space<vmem>>, vector<1x8xf32>
    %12 = vector.broadcast %11 : vector<1x8xf32> to vector<8x8xf32>
    %13 = arith.addf %10, %12 : vector<8x8xf32>
    %c0_11 = arith.constant 0 : index
    %c0_12 = arith.constant 0 : index
    %14 = vector.load %arg6[%c0_11, %c0_12] : memref<8x8xf32, #tpu.memory_space<vmem>>, vector<8x8xf32>
    tpu.vector_store %arg6[%c0_11, %c0_12], %13 {strides = array<i32>} : memref<8x8xf32, #tpu.memory_space<vmem>>, vector<8x8xf32>,
    return
  }
  func.func @transform_0(%arg0: i32) -> (i32, i32) {
    %c0_i32 = arith.constant 0 : i32
    %c0_i32_0 = arith.constant 0 : i32
    return %arg0, %c0_i32 : i32, i32
  }
  func.func @transform_1(%arg0: i32) -> (i32, i32) {
    %c0_i32 = arith.constant 0 : i32
    %c0_i32_0 = arith.constant 0 : i32
    %c0_i32_1 = arith.constant 0 : i32
    return %c0_i32, %c0_i32_0 : i32, i32
  }
  func.func @transform_2(%arg0: i32) -> (i32, i32) {
    %c0_i32 = arith.constant 0 : i32
    %c0_i32_0 = arith.constant 0 : i32
    %c0_i32_1 = arith.constant 0 : i32
    return %c0_i32, %c0_i32_0 : i32, i32
  }
  func.func @transform_3(%arg0: i32) -> (i32, i32) {
    %c0_i32 = arith.constant 0 : i32
    %c0_i32_0 = arith.constant 0 : i32
    %c0_i32_1 = arith.constant 0 : i32
    return %c0_i32, %c0_i32_0 : i32, i32
  }
  func.func @transform_4(%arg0: i32) -> (i32, i32) {
    %c0_i32 = arith.constant 0 : i32
    %c0_i32_0 = arith.constant 0 : i32
    %c0_i32_1 = arith.constant 0 : i32
    return %c0_i32, %c0_i32_0 : i32, i32
  }
  func.func @transform_5(%arg0: i32) -> (i32, i32) {
    %c0_i32 = arith.constant 0 : i32
    %c0_i32_0 = arith.constant 0 : i32
    return %arg0, %c0_i32 : i32, i32
  }
}

</mosaic_0001>

<llo_original>
// kernel: tpu_custom_call.1
$region0: #{tpu_custom_call.1}
  #allocation0 [shape = 'u32[]', space=smem, size = 0x4, offset = 0x4, fixed_abs, tag = 'smem constant byte address 0x4 - core index']
  #allocation1 [shape = 'u32[144,128]{1,0:T(1,128)}', space=vmem, size = 0x12000, scoped, tag = 'internal scratch']
  %s0 = inlined_call_operand.hbm [shape: f32[8,32], index: 0, kind: input, shape index: {}]
  %s1 = inlined_call_operand.hbm [shape: f32[32,128], index: 1, kind: input, shape index: {}]
  %s2 = inlined_call_operand.vmem [shape: f32[1,128], index: 2, kind: input, shape index: {}]
  %s3 = inlined_call_operand.hbm [shape: f32[128,128], index: 3, kind: input, shape index: {}]
  %s4 = inlined_call_operand.vmem [shape: f32[1,8], index: 4, kind: input, shape index: {}]
  %s5 = inlined_call_operand.hbm [shape: f32[8,8], index: 5, kind: output, shape index: {}]
  %s6 = sld [smem:[#allocation0]]
  $region42: #{tpu_custom_call.1} parent=0
    _
  %s8 = ssub.s32 1, %s6
  %s9 = scalar_select 0, %s8, %s6
  $region1: #{tpu_custom_call.1} parent=0
    #allocation2 [shape = 'u8[4096]{0}', space=vmem, size = 0x1000, scoped, tag = 'input window, operand 0, single buffered']
    #allocation3 [shape = 's32[1]{0}', space=sflag, size = 0x4, scoped, tag = 'scoped memory for tpu_custom_call.1']
    #allocation4 [shape = 's32[1]{0}', space=sflag, size = 0x4, scoped, tag = 'scoped memory for tpu_custom_call.1']
    #allocation5 [shape = 'u8[16384]{0}', space=vmem, size = 0x4000, scoped, tag = 'input window, operand 1, single buffered']
    #allocation6 [shape = 's32[1]{0}', space=sflag, size = 0x4, scoped, tag = 'scoped memory for tpu_custom_call.1']
    #allocation7 [shape = 'u8[65536]{0}', space=vmem, size = 0x10000, scoped, tag = 'input window, operand 3, single buffered']
    #allocation8 [shape = 'u8[4096]{0}', space=vmem, size = 0x1000, scoped, tag = 'output window, operand 0, single buffered']
    %10 = vsyncpa [#allocation3], 0
    %11 = vsyncpa [#allocation6], 0
    %12 = vsyncpa [#allocation4], 0
    // Predicated region
    $region2: #{tpu_custom_call.1} parent=1 // pred_check
      _
    $region3: #{tpu_custom_call.1} parent=1 // pred_check_branch
      %14 = sbr.rel (0) target = $region5
    $region4: #{tpu_custom_call.1} parent=1 // pred_region
      %s16 = ssub.s32 128, 128
      %17 = vsyncadd [#allocation3], %s16
      %s19 = sshll.u32 [#allocation2], 4
      %s20 = int_to_ptr.vmem [resolvable:$true] %s19
      %22 = dma.hbm_to_vmem [thread:$0]  %s0, 128, %s20, [#allocation3]
    $region5: #{tpu_custom_call.1} parent=1 // pred_fallthru
      _
    // Predicated region
    $region6: #{tpu_custom_call.1} parent=1 // pred_check
      _
    $region7: #{tpu_custom_call.1} parent=1 // pred_check_branch
      %24 = sbr.rel (0) target = $region9
    $region8: #{tpu_custom_call.1} parent=1 // pred_region
      %s26 = ssub.s32 512, 512
      %27 = vsyncadd [#allocation6], %s26
      %s28 = sshll.u32 [#allocation5], 4
      %s29 = int_to_ptr.vmem [resolvable:$true] %s28
      %34 = dma.hbm_to_vmem [thread:$0]  %s1, 512, %s29, [#allocation6], 128, 128, 8
    $region9: #{tpu_custom_call.1} parent=1 // pred_fallthru
      _
    // Predicated region
    $region10: #{tpu_custom_call.1} parent=1 // pred_check
      _
    $region11: #{tpu_custom_call.1} parent=1 // pred_check_branch
      %36 = sbr.rel (0) target = $region13
    $region12: #{tpu_custom_call.1} parent=1 // pred_region
      _
    $region13: #{tpu_custom_call.1} parent=1 // pred_fallthru
      _
    // Predicated region
    $region14: #{tpu_custom_call.1} parent=1 // pred_check
      _
    $region15: #{tpu_custom_call.1} parent=1 // pred_check_branch
      %38 = sbr.rel (0) target = $region17
    $region16: #{tpu_custom_call.1} parent=1 // pred_region
      %s40 = ssub.s32 2048, 2048
      %41 = vsyncadd [#allocation6], %s40
      %s42 = sshll.u32 [#allocation7], 4
      %s43 = int_to_ptr.vmem [resolvable:$true] %s42
      %48 = dma.hbm_to_vmem [thread:$0]  %s3, 2048, %s43, [#allocation6], 128, 128, 8
    $region17: #{tpu_custom_call.1} parent=1 // pred_fallthru
      _
    // Predicated region
    $region18: #{tpu_custom_call.1} parent=1 // pred_check
      _
    $region19: #{tpu_custom_call.1} parent=1 // pred_check_branch
      %50 = sbr.rel (0) target = $region21
    $region20: #{tpu_custom_call.1} parent=1 // pred_region
      _
    $region21: #{tpu_custom_call.1} parent=1 // pred_fallthru
      _
    // Predicated region
    $region22: #{tpu_custom_call.1} parent=1 // pred_check
      _
    $region23: #{tpu_custom_call.1} parent=1 // pred_check_branch
      %52 = sbr.rel (0) target = $region25
    $region24: #{tpu_custom_call.1} parent=1 // pred_region
      %53 = dma.done [#allocation3], 128
    $region25: #{tpu_custom_call.1} parent=1 // pred_fallthru
      _
    // Predicated region
    $region26: #{tpu_custom_call.1} parent=1 // pred_check
      _
    $region27: #{tpu_custom_call.1} parent=1 // pred_check_branch
      %55 = sbr.rel (0) target = $region29
    $region28: #{tpu_custom_call.1} parent=1 // pred_region
      %56 = dma.done [#allocation6], 512
    $region29: #{tpu_custom_call.1} parent=1 // pred_fallthru
      _
    // Predicated region
    $region30: #{tpu_custom_call.1} parent=1 // pred_check
      _
    $region31: #{tpu_custom_call.1} parent=1 // pred_check_branch
      %58 = sbr.rel (0) target = $region33
    $region32: #{tpu_custom_call.1} parent=1 // pred_region
      %59 = dma.done [#allocation6], 2048
    $region33: #{tpu_custom_call.1} parent=1 // pred_fallthru
      _
    %v60 = vld [vmem:[#allocation2] sm:$0xff]
    %v61 = vld [vmem:[#allocation5] sm:$0xff]
    %v62 = vld [vmem:[#allocation5 + $0x8] sm:$0xff]
    %v63 = vld [vmem:[#allocation5 + $0x10] sm:$0xff]
    %v64 = vld [vmem:[#allocation5 + $0x18] sm:$0xff]
    %v65 = vld [vmem:[%s2] sm:$0x1]
    %v67 = vlaneseq
    %v68 = vshrl.u32 %v67, 7
    %v69 = vsub.s32 0, %v68
    %v70 = vrot.slane %v65, %v69
    %vm72 = vcmask 261120
    %v74 = vsel %vm72, %v60, 0
    %76 = vmatprep.subr.mxu0 0.0
    %77 = vmatpush1.msra.mxu0 %v61
    %78 = vmatprep.subr.mxu0 0.0
    %79 = vmatpush1.msra.mxu0 %v62
    %80 = vmatprep.subr.mxu0 0.0
    %81 = vmatpush1.msra.mxu0 %v63
    %82 = vmatprep.subr.mxu0 0.0
    %83 = vmatpush1.msra.mxu0 %v64
    %84 = vmatprep.subr.mxu0 0.0
    %85 = vmatpush1.msra.mxu0 0.0
    %86 = vmatprep.subr.mxu0 0.0
    %87 = vmatpush1.msra.mxu0 0.0
    %88 = vmatprep.subr.mxu0 0.0
    %89 = vmatpush1.msra.mxu0 0.0
    %90 = vmatprep.subr.mxu0 0.0
    %91 = vmatpush1.msra.mxu0 0.0
    %92 = vmatprep.subr.mxu0 0.0
    %93 = vmatpush1.msra.mxu0 0.0
    %94 = vmatprep.subr.mxu0 0.0
    %95 = vmatpush1.msra.mxu0 0.0
    %96 = vmatprep.subr.mxu0 0.0
    %97 = vmatpush1.msra.mxu0 0.0
    %98 = vmatprep.subr.mxu0 0.0
    %99 = vmatpush1.msra.mxu0 0.0
    %100 = vmatprep.subr.mxu0 0.0
    %101 = vmatpush1.msra.mxu0 0.0
    %102 = vmatprep.subr.mxu0 0.0
    %103 = vmatpush1.msra.mxu0 0.0
    %104 = vmatprep.subr.mxu0 0.0
    %105 = vmatpush1.msra.mxu0 0.0
    %106 = vmatprep.subr.mxu0 0.0
    %107 = vmatpush1.msra.mxu0 0.0
    %108 = vmatprep.subr.mxu0 0.0
    %109 = vmatpush1.msra.mxu0 0.0
    %110 = vmatprep.subr.mxu0 0.0
    %111 = vmatpush1.msra.mxu0 0.0
    %112 = vmatprep.subr.mxu0 0.0
    %113 = vmatpush1.msra.mxu0 0.0
    %114 = vmatprep.subr.mxu0 0.0
    %115 = vmatpush1.msra.mxu0 0.0
    %116 = vmatprep.subr.mxu0 0.0
    %117 = vmatpush1.msra.mxu0 0.0
    %118 = vmatprep.subr.mxu0 0.0
    %119 = vmatpush1.msra.mxu0 0.0
    %120 = vmatprep.subr.mxu0 0.0
    %121 = vmatpush1.msra.mxu0 0.0
    %122 = vmatprep.subr.mxu0 0.0
    %123 = vmatpush1.msra.mxu0 0.0
    %124 = vmatprep.subr.mxu0 0.0
    %125 = vmatpush1.msra.mxu0 0.0
    %126 = vmatprep.subr.mxu0 0.0
    %127 = vmatpush1.msra.mxu0 0.0
    %128 = vmatprep.subr.mxu0 0.0
    %129 = vmatpush1.msra.mxu0 0.0
    %130 = vmatprep.subr.mxu0 0.0
    %131 = vmatpush1.msra.mxu0 0.0
    %132 = vmatprep.subr.mxu0 0.0
    %133 = vmatpush1.msra.mxu0 0.0
    %134 = vmatprep.subr.mxu0 0.0
    %135 = vmatpush1.msra.mxu0 0.0
    %136 = vmatprep.subr.mxu0 0.0
    %137 = vmatpush1.msra.mxu0 0.0
    %138 = vmatprep.subr.mxu0 0.0
    %139 = vmatpush1.msra.mxu0 0.0
    %140 = vmatprep.mubr.f32.mxu0 0.0
    %141 = vmatmul.mubr.f32.gmra.mrb[0].mxu0 %v74
    %v142 = vpop.f32.mrb[0].mxu0
    %v143 = vadd.f32 %v70, %v142
    %v144 = vpop.f32.mrb[0].mxu0
    %145 = vdwg.mxu0
    %v146 = vmax.f32 %v143, 0.0
    %v147 = vld [vmem:[#allocation7] sm:$0xff]
    %v148 = vld [vmem:[#allocation7 + $0x8] sm:$0xff]
    %v149 = vld [vmem:[#allocation7 + $0x10] sm:$0xff]
    %v150 = vld [vmem:[#allocation7 + $0x18] sm:$0xff]
    %v151 = vld [vmem:[#allocation7 + $0x20] sm:$0xff]
    %v152 = vld [vmem:[#allocation7 + $0x28] sm:$0xff]
    %v153 = vld [vmem:[#allocation7 + $0x30] sm:$0xff]
    %v154 = vld [vmem:[#allocation7 + $0x38] sm:$0xff]
    %v155 = vld [vmem:[#allocation7 + $0x40] sm:$0xff]
    %v156 = vld [vmem:[#allocation7 + $0x48] sm:$0xff]
    %v157 = vld [vmem:[#allocation7 + $0x50] sm:$0xff]
    %v158 = vld [vmem:[#allocation7 + $0x58] sm:$0xff]
    %v159 = vld [vmem:[#allocation7 + $0x60] sm:$0xff]
    %v160 = vld [vmem:[#allocation7 + $0x68] sm:$0xff]
    %v161 = vld [vmem:[#allocation7 + $0x70] sm:$0xff]
    %v162 = vld [vmem:[#allocation7 + $0x78] sm:$0xff]
    %163 = vmatprep.subr.mxu0 0.0
    %164 = vmatpush1.msra.mxu0 %v147
    %165 = vmatprep.subr.mxu0 0.0
    %166 = vmatpush1.msra.mxu0 %v148
    %167 = vmatprep.subr.mxu0 0.0
    %168 = vmatpush1.msra.mxu0 %v149
    %169 = vmatprep.subr.mxu0 0.0
    %170 = vmatpush1.msra.mxu0 %v150
    %171 = vmatprep.subr.mxu0 0.0
    %172 = vmatpush1.msra.mxu0 %v151
    %173 = vmatprep.subr.mxu0 0.0
    %174 = vmatpush1.msra.mxu0 %v152
    %175 = vmatprep.subr.mxu0 0.0
    %176 = vmatpush1.msra.mxu0 %v153
    %177 = vmatprep.subr.mxu0 0.0
    %178 = vmatpush1.msra.mxu0 %v154
    %179 = vmatprep.subr.mxu0 0.0
    %180 = vmatpush1.msra.mxu0 %v155
    %181 = vmatprep.subr.mxu0 0.0
    %182 = vmatpush1.msra.mxu0 %v156
    %183 = vmatprep.subr.mxu0 0.0
    %184 = vmatpush1.msra.mxu0 %v157
    %185 = vmatprep.subr.mxu0 0.0
    %186 = vmatpush1.msra.mxu0 %v158
    %187 = vmatprep.subr.mxu0 0.0
    %188 = vmatpush1.msra.mxu0 %v159
    %189 = vmatprep.subr.mxu0 0.0
    %190 = vmatpush1.msra.mxu0 %v160
    %191 = vmatprep.subr.mxu0 0.0
    %192 = vmatpush1.msra.mxu0 %v161
    %193 = vmatprep.subr.mxu0 0.0
    %194 = vmatpush1.msra.mxu0 %v162
    %195 = vmatprep.subr.mxu0 0.0
    %196 = vmatpush1.msra.mxu0 0.0
    %197 = vmatprep.subr.mxu0 0.0
    %198 = vmatpush1.msra.mxu0 0.0
    %199 = vmatprep.subr.mxu0 0.0
    %200 = vmatpush1.msra.mxu0 0.0
    %201 = vmatprep.subr.mxu0 0.0
    %202 = vmatpush1.msra.mxu0 0.0
    %203 = vmatprep.subr.mxu0 0.0
    %204 = vmatpush1.msra.mxu0 0.0
    %205 = vmatprep.subr.mxu0 0.0
    %206 = vmatpush1.msra.mxu0 0.0
    %207 = vmatprep.subr.mxu0 0.0
    %208 = vmatpush1.msra.mxu0 0.0
    %209 = vmatprep.subr.mxu0 0.0
    %210 = vmatpush1.msra.mxu0 0.0
    %211 = vmatprep.subr.mxu0 0.0
    %212 = vmatpush1.msra.mxu0 0.0
    %213 = vmatprep.subr.mxu0 0.0
    %214 = vmatpush1.msra.mxu0 0.0
    %215 = vmatprep.subr.mxu0 0.0
    %216 = vmatpush1.msra.mxu0 0.0
    %217 = vmatprep.subr.mxu0 0.0
    %218 = vmatpush1.msra.mxu0 0.0
    %219 = vmatprep.subr.mxu0 0.0
    %220 = vmatpush1.msra.mxu0 0.0
    %221 = vmatprep.subr.mxu0 0.0
    %222 = vmatpush1.msra.mxu0 0.0
    %223 = vmatprep.subr.mxu0 0.0
    %224 = vmatpush1.msra.mxu0 0.0
    %225 = vmatprep.subr.mxu0 0.0
    %226 = vmatpush1.msra.mxu0 0.0
    %227 = vmatprep.mubr.f32.mxu0 0.0
    %228 = vmatmul.mubr.f32.gmra.mrb[0].mxu0 %v146
    %v229 = vpop.f32.mrb[0].mxu0
    %v230 = vadd.f32 0.0, %v229
    %v231 = vpop.f32.mrb[0].mxu0
    %232 = vdwg.mxu0
    %v233 = vld [vmem:[%s4] sm:$0x1]
    %v235 = vlaneseq
    %v236 = vshrl.u32 %v235, 7
    %v237 = vsub.s32 0, %v236
    %v238 = vrot.slane %v233, %v237
    %v240 = vadd.f32 %v230, %v238
    %vm241 = vcmask 64512
    %242 = vst.msk [vmem:[#allocation8] sm:$0xff] %vm241, %v240
    // Predicated region
    $region34: #{tpu_custom_call.1} parent=1 // pred_check
      _
    $region35: #{tpu_custom_call.1} parent=1 // pred_check_branch
      %244 = sbr.rel (0) target = $region37
    $region36: #{tpu_custom_call.1} parent=1 // pred_region
      %s246 = ssub.s32 128, 128
      %247 = vsyncadd [#allocation4], %s246
      %s249 = sshll.u32 [#allocation8], 4
      %s250 = int_to_ptr.vmem [resolvable:$true] %s249
      %252 = dma.vmem_to_hbm [thread:$0]  %s250, 128, %s5, [#allocation4]
    $region37: #{tpu_custom_call.1} parent=1 // pred_fallthru
      _
    // Predicated region
    $region38: #{tpu_custom_call.1} parent=1 // pred_check
      _
    $region39: #{tpu_custom_call.1} parent=1 // pred_check_branch
      %254 = sbr.rel (0) target = $region41
    $region40: #{tpu_custom_call.1} parent=1 // pred_region
      %255 = dma.done [#allocation4], 128
    $region41: #{tpu_custom_call.1} parent=1 // pred_fallthru
      _
    %256 = vsyncpa [#allocation3], 1
    %257 = vsyncpa [#allocation6], 1
    %258 = vsyncpa [#allocation4], 1

</llo_original>
